<compile_context>
chip_gen: v5e
topology: v5e:2x2
jax: 0.10.0
libtpu: 0.0.40
codegen_flags: <defaults>
</compile_context>

<pallas_src>
import functools

import jax
import jax.numpy as jnp
from jax.experimental import pallas as pl
from jax.experimental.pallas import tpu as pltpu


def _rmsnorm_kernel(x_ref, w_ref, o_ref, *, eps):
    # x_ref: (ROW_TILE, H) in the input dtype
    # w_ref: (1, H) weight (broadcast over rows)
    x_in = x_ref[...]
    x = x_in.astype(jnp.float32)
    variance = jnp.mean(x * x, axis=-1, keepdims=True)
    normed = x * jax.lax.rsqrt(variance + eps)
    # cast back to the input dtype BEFORE applying the weight (exactly as PyTorch)
    normed_in = normed.astype(x_in.dtype)
    o_ref[...] = (w_ref[...] * normed_in).astype(o_ref.dtype)


def pixtral_rmsnorm(hidden_states, weight, eps=1e-6, max_block_bytes=32 << 20):
    """RMSNorm over the last axis of `hidden_states` using a Pallas TPU kernel.

    hidden_states: (..., hidden)
    weight:        (hidden,)  (float32 in the PyTorch module)
    max_block_bytes: cap on the double-buffered (input + output) block bytes.
    """
    orig_shape = hidden_states.shape
    hidden = orig_shape[-1]
    rows = 1
    for d in orig_shape[:-1]:
        rows *= d

    x2d = hidden_states.reshape(rows, hidden)
    w2d = weight.reshape(1, hidden)

    # Output dtype follows torch promotion: weight(f32) * x.to(input_dtype)
    out_dtype = jnp.promote_types(hidden_states.dtype, weight.dtype)

    in_bytes = jnp.dtype(hidden_states.dtype).itemsize
    out_bytes = jnp.dtype(out_dtype).itemsize

    # Sublane-packing factor: 8 rows for f32, 16 for bf16, 32 for int8/fp8.
    pack = max(8, 32 // max(1, in_bytes))

    # Largest pack-aligned row tile whose double-buffered in+out blocks fit in
    # max_block_bytes, capped at 1024 rows (HBM roofline reached well before).
    per_row_bytes = hidden * (in_bytes + out_bytes)
    rt_cap = max(pack, max_block_bytes // (2 * max(1, per_row_bytes)))
    rt_cap = max(pack, (rt_cap // pack) * pack)
    rt_cap = min(rt_cap, 1024)

    if rows <= rt_cap:
        # Single block covering all rows: block dim equals full array dim,
        # so no (8,128) divisibility requirement applies.
        rt = rows
    else:
        rt = rt_cap  # multiple of `pack` (>= 8)

    grid = (pl.cdiv(rows, rt),)  # partial last block is fine: per-row reduction

    # VMEM budget: 2 buffers each for input and output blocks + weight + slack.
    needed = (2 * rt * hidden * in_bytes
              + 2 * rt * hidden * out_bytes
              + 2 * hidden * 4
              + (2 << 20))
    vmem_limit = int(min(max(needed, 16 << 20), 48 << 20))

    cost = pl.CostEstimate(
        flops=4 * rows * hidden,
        transcendentals=rows,
        bytes_accessed=rows * hidden * (in_bytes + out_bytes) + hidden * 4,
    )

    kernel = functools.partial(_rmsnorm_kernel, eps=eps)

    out2d = pl.pallas_call(
        kernel,
        out_shape=jax.ShapeDtypeStruct((rows, hidden), out_dtype),
        grid_spec=pltpu.PrefetchScalarGridSpec(
            num_scalar_prefetch=0,
            grid=grid,
            in_specs=[
                pl.BlockSpec((rt, hidden), lambda i: (i, 0)),
                pl.BlockSpec((1, hidden), lambda i: (0, 0)),
            ],
            out_specs=pl.BlockSpec((rt, hidden), lambda i: (i, 0)),
        ),
        compiler_params=pltpu.CompilerParams(
            dimension_semantics=("parallel",),
            vmem_limit_bytes=vmem_limit,
        ),
        cost_estimate=cost,
    )(x2d, w2d)

    return out2d.reshape(orig_shape[:-1] + (hidden,))


def _reference(x, weight, eps):
    xf = x.astype(jnp.float32)
    var = jnp.mean(xf * xf, axis=-1, keepdims=True)
    return weight * (xf * jax.lax.rsqrt(var + eps)).astype(x.dtype)


if __name__ == "__main__":
    key = jax.random.PRNGKey(0)
    eps = 1e-6

    # --- Test 1: bf16 input (exercises cast-to-fp32 / cast-back + f32 output) ---
    batch, seq, hidden = 2, 8, 32
    k1, k2 = jax.random.split(key)
    x = jax.random.normal(k1, (batch, seq, hidden), dtype=jnp.float32).astype(
        jnp.bfloat16)
    weight = jnp.ones((hidden,), dtype=jnp.float32)  # module init: ones, f32

    out = jax.block_until_ready(pixtral_rmsnorm(x, weight, eps=eps))
    ref = _reference(x, weight, eps)
    assert out.shape == ref.shape and out.dtype == ref.dtype
    assert jnp.allclose(out, ref, atol=1e-2, rtol=1e-2)

    # --- Test 2: f32 input with a row count that forces a partial last block ---
    x2 = jax.random.normal(k2, (3, 13, hidden), dtype=jnp.float32)
    # Tiny max_block_bytes forces rt < rows with rows % rt != 0 (cdiv tail path).
    out2 = jax.block_until_ready(
        pixtral_rmsnorm(x2, weight, eps=eps, max_block_bytes=8192))
    ref2 = _reference(x2, weight, eps)
    assert out2.shape == ref2.shape and out2.dtype == ref2.dtype
    assert jnp.allclose(out2, ref2, atol=1e-5, rtol=1e-5)

    print("KERNEL_OK")
</pallas_src>

<mosaic_0001>
module attributes {stable_mosaic.version = 11 : i64} {
  func.func @_rmsnorm_kernel(%arg0: i32, %arg1: memref<16x32xbf16, #tpu.memory_space<vmem>>, %arg2: memref<1x32xf32, #tpu.memory_space<vmem>>, %arg3: memref<16x32xf32, #tpu.memory_space<vmem>>) attributes {dimension_semantics = [#tpu.dimension_semantics<parallel>], iteration_bounds = array<i64: 1>, scalar_prefetch = 0 : i64, scratch_operands = 0 : i64, tpu.core_type = #tpu.core_type<tc>, window_params = [{transform_indices = @transform_0, window_bounds = array<i64: 16, 32>}, {pipeline_mode = #tpu.pipeline_mode<synchronous>, transform_indices = @transform_1, window_bounds = array<i64: 1, 32>}, {transform_indices = @transform_2, window_bounds = array<i64: 16, 32>}]} {
    %c0 = arith.constant 0 : index
    %c0_0 = arith.constant 0 : index
    %0 = vector.load %arg1[%c0, %c0_0] : memref<16x32xbf16, #tpu.memory_space<vmem>>, vector<16x32xbf16>
    %1 = arith.extf %0 : vector<16x32xbf16> to vector<16x32xf32>
    %2 = arith.mulf %1, %1 : vector<16x32xf32>
    %cst = arith.constant dense<0.000000e+00> : vector<16xf32>
    %3 = vector.multi_reduction <add>, %2, %cst [1] : vector<16x32xf32> to vector<16xf32>
    %4 = vector.shape_cast %3 : vector<16xf32> to vector<16x1xf32>
    %cst_1 = arith.constant 3.200000e+01 : f32
    %5 = vector.broadcast %cst_1 : f32 to vector<16x1xf32>
    %6 = arith.divf %4, %5 : vector<16x1xf32>
    %cst_2 = arith.constant 9.99999997E-7 : f32
    %7 = vector.broadcast %cst_2 : f32 to vector<16x1xf32>
    %8 = arith.addf %6, %7 : vector<16x1xf32>
    %9 = math.rsqrt %8 : vector<16x1xf32>
    %10 = vector.broadcast %9 : vector<16x1xf32> to vector<16x32xf32>
    %11 = arith.mulf %1, %10 : vector<16x32xf32>
    %12 = arith.truncf %11 : vector<16x32xf32> to vector<16x32xbf16>
    %c0_3 = arith.constant 0 : index
    %c0_4 = arith.constant 0 : index
    %13 = vector.load %arg2[%c0_3, %c0_4] : memref<1x32xf32, #tpu.memory_space<vmem>>, vector<1x32xf32>
    %14 = arith.extf %12 : vector<16x32xbf16> to vector<16x32xf32>
    %15 = vector.broadcast %13 : vector<1x32xf32> to vector<16x32xf32>
    %16 = arith.mulf %15, %14 : vector<16x32xf32>
    %c0_5 = arith.constant 0 : index
    %c0_6 = arith.constant 0 : index
    %17 = vector.load %arg3[%c0_5, %c0_6] : memref<16x32xf32, #tpu.memory_space<vmem>>, vector<16x32xf32>
    tpu.vector_store %arg3[%c0_5, %c0_6], %16 {strides = array<i32>} : memref<16x32xf32, #tpu.memory_space<vmem>>, vector<16x32xf32>,
    return
  }
  func.func @transform_0(%arg0: i32) -> (i32, i32) {
    %c0_i32 = arith.constant 0 : i32
    %c0_i32_0 = arith.constant 0 : i32
    return %arg0, %c0_i32 : i32, i32
  }
  func.func @transform_1(%arg0: i32) -> (i32, i32) {
    %c0_i32 = arith.constant 0 : i32
    %c0_i32_0 = arith.constant 0 : i32
    %c0_i32_1 = arith.constant 0 : i32
    return %c0_i32, %c0_i32_0 : i32, i32
  }
  func.func @transform_2(%arg0: i32) -> (i32, i32) {
    %c0_i32 = arith.constant 0 : i32
    %c0_i32_0 = arith.constant 0 : i32
    return %arg0, %c0_i32 : i32, i32
  }
}

</mosaic_0001>

<llo_original>
// kernel: tpu_custom_call.1
$region0: #{tpu_custom_call.1}
  #allocation0 [shape = 'u32[]', space=smem, size = 0x4, offset = 0x4, fixed_abs, tag = 'smem constant byte address 0x4 - core index']
  #allocation1 [shape = 'u32[72,128]{1,0:T(1,128)}', space=vmem, size = 0x9000, scoped, tag = 'internal scratch']
  %s0 = inlined_call_operand.hbm [shape: bf16[16,32], index: 0, kind: input, shape index: {}]
  %s1 = inlined_call_operand.hbm [shape: f32[1,32], index: 1, kind: input, shape index: {}]
  %s2 = inlined_call_operand.hbm [shape: f32[16,32], index: 2, kind: output, shape index: {}]
  %s3 = sld [smem:[#allocation0]]
  $region26: #{tpu_custom_call.1} parent=0
    _
  %s5 = ssub.s32 1, %s3
  %s6 = scalar_select 0, %s5, %s3
  $region1: #{tpu_custom_call.1} parent=0
    #allocation2 [shape = 'u8[4096]{0}', space=vmem, size = 0x1000, scoped, tag = 'input window, operand 0, single buffered']
    #allocation3 [shape = 's32[1]{0}', space=sflag, size = 0x4, scoped, tag = 'scoped memory for tpu_custom_call.1']
    #allocation4 [shape = 's32[1]{0}', space=sflag, size = 0x4, scoped, tag = 'scoped memory for tpu_custom_call.1']
    #allocation5 [shape = 'u8[512]{0}', space=vmem, size = 0x400, scoped, tag = 'input window, operand 1, single buffered']
    #allocation6 [shape = 's32[1]{0}', space=sflag, size = 0x4, scoped, tag = 'scoped memory for tpu_custom_call.1']
    #allocation7 [shape = 'u8[8192]{0}', space=vmem, size = 0x2000, scoped, tag = 'output window, operand 0, single buffered']
    %7 = vsyncpa [#allocation3], 0
    %8 = vsyncpa [#allocation6], 0
    %9 = vsyncpa [#allocation4], 0
    // Predicated region
    $region2: #{tpu_custom_call.1} parent=1 // pred_check
      _
    $region3: #{tpu_custom_call.1} parent=1 // pred_check_branch
      %11 = sbr.rel (0) target = $region5
    $region4: #{tpu_custom_call.1} parent=1 // pred_region
      %13 = vsyncadd [#allocation3], 0
      %s14 = sshll.u32 %s0, 4
      %s15 = int_to_ptr.hbm [resolvable:$true] %s14
      %s16 = sshll.u32 [#allocation2], 4
      %s17 = int_to_ptr.vmem [resolvable:$true] %s16
      %22 = dma.hbm_to_vmem [thread:$0]  %s15, 128, %s17, [#allocation3], 64, 64, 4
    $region5: #{tpu_custom_call.1} parent=1 // pred_fallthru
      _
    // Predicated region
    $region6: #{tpu_custom_call.1} parent=1 // pred_check
      _
    $region7: #{tpu_custom_call.1} parent=1 // pred_check_branch
      %24 = sbr.rel (0) target = $region9
    $region8: #{tpu_custom_call.1} parent=1 // pred_region
      %26 = vsyncadd [#allocation6], 0
      %s28 = sshll.u32 %s1, 4
      %s29 = int_to_ptr.hbm [resolvable:$true] %s28
      %s30 = sshll.u32 [#allocation5], 4
      %s31 = int_to_ptr.vmem [resolvable:$true] %s30
      %33 = dma.hbm_to_vmem [thread:$0]  %s29, 16, %s31, [#allocation6]
    $region9: #{tpu_custom_call.1} parent=1 // pred_fallthru
      _
    // Predicated region
    $region10: #{tpu_custom_call.1} parent=1 // pred_check
      _
    $region11: #{tpu_custom_call.1} parent=1 // pred_check_branch
      %35 = sbr.rel (0) target = $region13
    $region12: #{tpu_custom_call.1} parent=1 // pred_region
      %37 = dma.done [#allocation3], 128
    $region13: #{tpu_custom_call.1} parent=1 // pred_fallthru
      _
    // Predicated region
    $region14: #{tpu_custom_call.1} parent=1 // pred_check
      _
    $region15: #{tpu_custom_call.1} parent=1 // pred_check_branch
      %39 = sbr.rel (0) target = $region17
    $region16: #{tpu_custom_call.1} parent=1 // pred_region
      %41 = dma.done [#allocation6], 16
    $region17: #{tpu_custom_call.1} parent=1 // pred_fallthru
      _
    %v42 = vld [vmem:[#allocation2] sm:$0xf]
    %v43 = vld [vmem:[#allocation2 + $0x4] sm:$0xf]
    %v44 = vunpack.c.l.bf16 %v42
    %v45 = vunpack.c.l.bf16 %v43
    %v46 = vmul.f32 %v44, %v44
    %v47 = vmul.f32 %v45, %v45
    %vm48 = vcmask 261120
    %v49 = vsel %vm48, %v46, 0.0
    %50 = vadd.xlane.f32.xlu0 %v49
    %v51 = vpop.xlane.xlu0 %50
    %v52 = vsel %vm48, %v47, 0.0
    %53 = vadd.xlane.f32.xlu0 %v52
    %v54 = vpop.xlane.xlu0 %53
    %v55 = vrcp.pop 32.0
    %v56 = vmul.f32 32.0, %v55
    %v57 = vsub.f32 1.0, %v56
    %v58 = vmul.f32 %v55, %v57
    %v59 = vadd.f32 %v55, %v58
    %vm60 = vweird.f32 %v55
    %v61 = vsel %vm60, %v55, %v59
    %v62 = vmul.f32 %v51, %v61
    %v63 = vmul.f32 %v54, %v61
    %v64 = vadd.f32 %v62, 1e-06
    %v65 = vadd.f32 %v63, 1e-06
    %v66 = vrsqrt.pop %v64
    %v67 = vmul.f32 %v66, %v64
    %v68 = vmul.f32 %v67, %v66
    %v69 = vmul.f32 0.5, %v68
    %v70 = vsub.f32 1.5, %v69
    %v71 = vmul.f32 %v66, %v70
    %vm72 = vweird.f32 %v64
    %vm73 = vweird.f32 %v66
    %vm74 = vmor %vm72, %vm73
    %v75 = vsel %vm74, %v66, %v71
    %v76 = vrsqrt.pop %v65
    %v77 = vmul.f32 %v76, %v65
    %v78 = vmul.f32 %v77, %v76
    %v79 = vmul.f32 0.5, %v78
    %v80 = vsub.f32 1.5, %v79
    %v81 = vmul.f32 %v76, %v80
    %vm82 = vweird.f32 %v65
    %vm83 = vweird.f32 %v76
    %vm84 = vmor %vm82, %vm83
    %v85 = vsel %vm84, %v76, %v81
    %v86 = vmul.f32 %v44, %v75
    %v87 = vmul.f32 %v45, %v85
    %v88 = vpack.c.bf16 %v86, %v86
    %v89 = vpack.c.bf16 %v87, %v87
    %v90 = vld [vmem:[#allocation5] sm:$0x1]
    %v91 = vunpack.c.l.bf16 %v88
    %v92 = vunpack.c.l.bf16 %v89
    %v94 = vperm.slane %v90, 0
    %v96 = vmul.f32 %v94, %v91
    %v97 = vmul.f32 %v94, %v92
    %98 = vst.msk [vmem:[#allocation7] sm:$0xff] %vm48, %v96
    %99 = vst.msk [vmem:[#allocation7 + $0x8] sm:$0xff] %vm48, %v97
    // Predicated region
    $region18: #{tpu_custom_call.1} parent=1 // pred_check
      _
    $region19: #{tpu_custom_call.1} parent=1 // pred_check_branch
      %101 = sbr.rel (0) target = $region21
    $region20: #{tpu_custom_call.1} parent=1 // pred_region
      %103 = vsyncadd [#allocation4], 0
      %s104 = sshll.u32 [#allocation7], 4
      %s105 = int_to_ptr.vmem [resolvable:$true] %s104
      %s106 = sshll.u32 %s2, 4
      %s107 = int_to_ptr.hbm [resolvable:$true] %s106
      %112 = dma.vmem_to_hbm [thread:$0]  %s105, 256, %s107, [#allocation4], 128, 128, 8
    $region21: #{tpu_custom_call.1} parent=1 // pred_fallthru
      _
    // Predicated region
    $region22: #{tpu_custom_call.1} parent=1 // pred_check
      _
    $region23: #{tpu_custom_call.1} parent=1 // pred_check_branch
      %114 = sbr.rel (0) target = $region25
    $region24: #{tpu_custom_call.1} parent=1 // pred_region
      %116 = dma.done [#allocation4], 256
    $region25: #{tpu_custom_call.1} parent=1 // pred_fallthru
      _
    %117 = vsyncpa [#allocation3], 1
    %118 = vsyncpa [#allocation6], 1
    %119 = vsyncpa [#allocation4], 1

</llo_original>
